<compile_context>
chip_gen: v6e
topology: v6e:2x2x1
jax: 0.10.0
libtpu: 0.0.40
codegen_flags: <defaults>
</compile_context>

<pallas_src>
import functools
import math

import jax
import jax.numpy as jnp
from jax.experimental import pallas as pl
from jax.experimental.pallas import tpu as pltpu


def _sdpa_kernel(q_ref, k_ref, v_ref, ctx_ref, attn_ref, *, scale):
    # q_ref: (TB, 1, D)   k_ref/v_ref: (TB, K, D)
    # ctx_ref: (TB, 1, D) attn_ref: (TB, 1, K)
    q = q_ref[...]
    k = k_ref[...]
    v = v_ref[...]

    # logits = (q . k) * 1/(sqrt(dim)*temperature)   -> (TB, 1, K)
    logits = jnp.einsum("bqd,bkd->bqk", q, k,
                        preferred_element_type=jnp.float32) * scale

    m = jnp.max(logits, axis=-1, keepdims=True)
    e = jnp.exp(logits - m)
    attn = e * pl.reciprocal(jnp.sum(e, axis=-1, keepdims=True), approx=False)

    ctx = jnp.einsum("bqk,bkd->bqd", attn.astype(v.dtype), v,
                     preferred_element_type=jnp.float32)

    ctx_ref[...] = ctx.astype(ctx_ref.dtype)
    attn_ref[...] = attn.astype(attn_ref.dtype)


def _sdpa_trust_kernel(q_ref, k_ref, v_ref, t_ref, ctx_ref, attn_ref, *, scale):
    # Same as above plus trust score t_ref: (TB, 1, K).
    q = q_ref[...]
    k = k_ref[...]
    v = v_ref[...]
    t = t_ref[...].astype(jnp.float32)

    logits = jnp.einsum("bqd,bkd->bqk", q, k,
                        preferred_element_type=jnp.float32) * scale
    logits = logits * t                       # score * trust (pre-softmax)

    m = jnp.max(logits, axis=-1, keepdims=True)
    # Fused trust re-weighting + renormalization:
    #   softmax(logits)*t / sum(softmax(logits)*t) == e*t / sum(e*t)
    w = jnp.exp(logits - m) * t
    attn = w * pl.reciprocal(jnp.sum(w, axis=-1, keepdims=True), approx=False)

    ctx = jnp.einsum("bqk,bkd->bqd", attn.astype(v.dtype), v,
                     preferred_element_type=jnp.float32)

    ctx_ref[...] = ctx.astype(ctx_ref.dtype)
    attn_ref[...] = attn.astype(attn_ref.dtype)


def _round_up(x, m):
    return ((x + m - 1) // m) * m


def _pick_block_b(B, k_len, D, itemsize):
    # Budget double-buffered K + V blocks against a conservative VMEM limit so
    # the default scoped VMEM works on v5e (16 MiB) and v7x (64 MiB physical).
    budget = 8 * 1024 * 1024
    per_b = 2 * 2 * k_len * D * itemsize      # K + V, double-buffered
    tb = max(1, budget // max(per_b, 1))
    return int(min(tb, 64, B))


def scaled_dot_product_attention(query, key, value, trust_score=None,
                                 *, dim=None, temperature=1.0, block_b=None):
    """JAX/Pallas equivalent of ScaledDotProductAttention.forward.

    query: (B, q_len, D), key: (B, k_len, D), value: (B, k_len, D)
    trust_score: None or broadcastable to (B, 1, k_len)
    Returns (context (B, 1, D), attn (B, 1, k_len)).
    """
    B, _, D = query.shape
    _, k_len, _ = key.shape
    if dim is None:
        dim = D
    # Fold both divisions into one compile-time scalar.
    scale = 1.0 / (math.sqrt(float(dim)) * float(temperature))

    # Only the first query row is consumed -> only DMA that row.
    q3 = query[:, 0:1, :]                                  # (B, 1, D)

    itemsize = jnp.dtype(query.dtype).itemsize
    tb = block_b if block_b is not None else _pick_block_b(B, k_len, D, itemsize)
    tb = max(1, min(tb, B)) if B >= 1 else 1
    Bp = _round_up(B, tb)

    key_p, value_p = key, value
    if Bp != B:
        pad = Bp - B
        q3 = jnp.pad(q3, ((0, pad), (0, 0), (0, 0)))
        key_p = jnp.pad(key, ((0, pad), (0, 0), (0, 0)))
        value_p = jnp.pad(value, ((0, pad), (0, 0), (0, 0)))

    grid = (Bp // tb,)
    q_spec = pl.BlockSpec((tb, 1, D), lambda b: (b, 0, 0))
    kv_spec = pl.BlockSpec((tb, k_len, D), lambda b: (b, 0, 0))
    out_specs = [
        pl.BlockSpec((tb, 1, D), lambda b: (b, 0, 0)),
        pl.BlockSpec((tb, 1, k_len), lambda b: (b, 0, 0)),
    ]
    out_shape = (
        jax.ShapeDtypeStruct((Bp, 1, D), query.dtype),
        jax.ShapeDtypeStruct((Bp, 1, k_len), jnp.float32),
    )
    cparams = pltpu.CompilerParams(dimension_semantics=("parallel",))

    if trust_score is None:
        # Specialized path: no trust tensor read, no trust math.
        kernel = functools.partial(_sdpa_kernel, scale=scale)
        grid_spec = pltpu.PrefetchScalarGridSpec(
            num_scalar_prefetch=0,
            grid=grid,
            in_specs=[q_spec, kv_spec, kv_spec],
            out_specs=out_specs,
        )
        ctx_p, attn_p = pl.pallas_call(
            kernel, out_shape=out_shape, grid_spec=grid_spec,
            compiler_params=cparams,
        )(q3, key_p, value_p)
    else:
        trust = jnp.broadcast_to(trust_score, (B, 1, k_len))
        if Bp != B:
            trust = jnp.pad(trust, ((0, Bp - B), (0, 0), (0, 0)),
                            constant_values=1)
        kernel = functools.partial(_sdpa_trust_kernel, scale=scale)
        grid_spec = pltpu.PrefetchScalarGridSpec(
            num_scalar_prefetch=0,
            grid=grid,
            in_specs=[q_spec, kv_spec, kv_spec,
                      pl.BlockSpec((tb, 1, k_len), lambda b: (b, 0, 0))],
            out_specs=out_specs,
        )
        ctx_p, attn_p = pl.pallas_call(
            kernel, out_shape=out_shape, grid_spec=grid_spec,
            compiler_params=cparams,
        )(q3, key_p, value_p, trust)

    return ctx_p[:B], attn_p[:B]


def _reference(query, key, value, trust_score=None, *, dim, temperature=1.0):
    """Pure-JAX reference mirroring the PyTorch forward."""
    score = jnp.einsum("bd,bkd->bk", query[:, 0, :], key)[:, None, :]
    score = score / jnp.sqrt(jnp.float32(dim))
    if trust_score is not None:
        score = score * trust_score
    attn = jax.nn.softmax(score / temperature, axis=-1)
    if trust_score is not None:
        attn = attn * trust_score
        attn = attn / jnp.sum(attn, axis=-1, keepdims=True)
    context = jnp.einsum("bqk,bkd->bqd", attn, value)
    return context, attn


if __name__ == "__main__":
    key0 = jax.random.PRNGKey(0)
    kq, kk, kv, kt = jax.random.split(key0, 4)

    B, q_len, k_len, D = 2, 8, 8, 32
    query = jax.random.normal(kq, (B, q_len, D), dtype=jnp.float32)
    key_ = jax.random.normal(kk, (B, k_len, D), dtype=jnp.float32)
    value = jax.random.normal(kv, (B, k_len, D), dtype=jnp.float32)
    trust = jax.random.uniform(kt, (B, 1, k_len), dtype=jnp.float32,
                               minval=0.5, maxval=1.5)

    # Path 1: no trust score (specialized kernel)
    ctx, attn = scaled_dot_product_attention(query, key_, value, None,
                                             dim=D, temperature=1.0)
    jax.block_until_ready(ctx)
    ctx_r, attn_r = _reference(query, key_, value, None, dim=D, temperature=1.0)
    assert jnp.allclose(ctx, ctx_r, atol=1e-5, rtol=1e-5)
    assert jnp.allclose(attn, attn_r, atol=1e-5, rtol=1e-5)

    # Path 2: with trust score and a non-unit temperature
    ctx2, attn2 = scaled_dot_product_attention(query, key_, value, trust,
                                               dim=D, temperature=2.0)
    jax.block_until_ready(ctx2)
    ctx2_r, attn2_r = _reference(query, key_, value, trust,
                                 dim=D, temperature=2.0)
    assert jnp.allclose(ctx2, ctx2_r, atol=1e-5, rtol=1e-5)
    assert jnp.allclose(attn2, attn2_r, atol=1e-5, rtol=1e-5)

    # Path 3: exercise batch tiling + padding (B not a multiple of block_b)
    B3 = 5
    q3 = jax.random.normal(kq, (B3, 3, D), dtype=jnp.float32)
    k3 = jax.random.normal(kk, (B3, k_len, D), dtype=jnp.float32)
    v3 = jax.random.normal(kv, (B3, k_len, D), dtype=jnp.float32)
    t3 = jax.random.uniform(kt, (B3, 1, k_len), dtype=jnp.float32,
                            minval=0.5, maxval=1.5)
    ctx3, attn3 = scaled_dot_product_attention(q3, k3, v3, t3,
                                               dim=D, temperature=1.0,
                                               block_b=4)
    jax.block_until_ready(ctx3)
    ctx3_r, attn3_r = _reference(q3, k3, v3, t3, dim=D, temperature=1.0)
    assert jnp.allclose(ctx3, ctx3_r, atol=1e-5, rtol=1e-5)
    assert jnp.allclose(attn3, attn3_r, atol=1e-5, rtol=1e-5)

    print("KERNEL_OK")
</pallas_src>

<mosaic_0001>
module attributes {stable_mosaic.version = 11 : i64} {
  func.func @_sdpa_kernel(%arg0: i32, %arg1: memref<2x1x32xf32, #tpu.memory_space<vmem>>, %arg2: memref<2x8x32xf32, #tpu.memory_space<vmem>>, %arg3: memref<2x8x32xf32, #tpu.memory_space<vmem>>, %arg4: memref<2x1x32xf32, #tpu.memory_space<vmem>>, %arg5: memref<2x1x8xf32, #tpu.memory_space<vmem>>) attributes {dimension_semantics = [#tpu.dimension_semantics<parallel>], iteration_bounds = array<i64: 1>, scalar_prefetch = 0 : i64, scratch_operands = 0 : i64, tpu.core_type = #tpu.core_type<tc>, window_params = [{transform_indices = @transform_0, window_bounds = array<i64: 2, 1, 32>}, {transform_indices = @transform_1, window_bounds = array<i64: 2, 8, 32>}, {transform_indices = @transform_2, window_bounds = array<i64: 2, 8, 32>}, {transform_indices = @transform_3, window_bounds = array<i64: 2, 1, 32>}, {transform_indices = @transform_4, window_bounds = array<i64: 2, 1, 8>}]} {
    %c0 = arith.constant 0 : index
    %c0_0 = arith.constant 0 : index
    %c0_1 = arith.constant 0 : index
    %0 = vector.load %arg1[%c0, %c0_0, %c0_1] : memref<2x1x32xf32, #tpu.memory_space<vmem>>, vector<2x1x32xf32>
    %c0_2 = arith.constant 0 : index
    %c0_3 = arith.constant 0 : index
    %c0_4 = arith.constant 0 : index
    %1 = vector.load %arg2[%c0_2, %c0_3, %c0_4] : memref<2x8x32xf32, #tpu.memory_space<vmem>>, vector<2x8x32xf32>
    %c0_5 = arith.constant 0 : index
    %c0_6 = arith.constant 0 : index
    %c0_7 = arith.constant 0 : index
    %2 = vector.load %arg3[%c0_5, %c0_6, %c0_7] : memref<2x8x32xf32, #tpu.memory_space<vmem>>, vector<2x8x32xf32>
    "tpu.trace_start"() <{level = 10 : i32, message = "bqd,bkd->bqk"}> : () -> ()
    %cst = arith.constant dense<0.000000e+00> : vector<2x1x8xf32>
    %3 = tpu.matmul %0, %1, %cst {dimension_numbers = #tpu.dot_dimension_numbers<[2], [2], [1], [1], [0, 0, 0, 1, 1, 1], [0], [0]>} : vector<2x1x32xf32>, vector<2x8x32xf32>, vector<2x1x8xf32> -> vector<2x1x8xf32>
    "tpu.trace_stop"() : () -> ()
    %cst_8 = arith.constant 0.176776692 : f32
    %4 = vector.broadcast %cst_8 : f32 to vector<2x1x8xf32>
    %5 = arith.mulf %3, %4 : vector<2x1x8xf32>
    %cst_9 = arith.constant dense<0xFF800000> : vector<2x1xf32>
    %6 = vector.multi_reduction <maximumf>, %5, %cst_9 [2] : vector<2x1x8xf32> to vector<2x1xf32>
    %7 = vector.shape_cast %6 : vector<2x1xf32> to vector<2x1x1xf32>
    %8 = vector.broadcast %7 : vector<2x1x1xf32> to vector<2x1x8xf32>
    %9 = arith.subf %5, %8 : vector<2x1x8xf32>
    %10 = math.exp %9 : vector<2x1x8xf32>
    %cst_10 = arith.constant dense<0.000000e+00> : vector<2x1xf32>
    %11 = vector.multi_reduction <add>, %10, %cst_10 [2] : vector<2x1x8xf32> to vector<2x1xf32>
    %12 = vector.shape_cast %11 : vector<2x1xf32> to vector<2x1x1xf32>
    %13 = tpu.reciprocal %12 : vector<2x1x1xf32> -> vector<2x1x1xf32>
    %14 = vector.broadcast %13 : vector<2x1x1xf32> to vector<2x1x8xf32>
    %15 = arith.mulf %10, %14 : vector<2x1x8xf32>
    "tpu.trace_start"() <{level = 10 : i32, message = "bqk,bkd->bqd"}> : () -> ()
    %cst_11 = arith.constant dense<0.000000e+00> : vector<2x1x32xf32>
    %16 = tpu.matmul %15, %2, %cst_11 {dimension_numbers = #tpu.dot_dimension_numbers<[2], [1], [1], [2], [0, 0, 0, 1, 1, 2], [0], [0]>} : vector<2x1x8xf32>, vector<2x8x32xf32>, vector<2x1x32xf32> -> vector<2x1x32xf32>
    "tpu.trace_stop"() : () -> ()
    %c0_12 = arith.constant 0 : index
    %c0_13 = arith.constant 0 : index
    %c0_14 = arith.constant 0 : index
    %17 = vector.load %arg4[%c0_12, %c0_13, %c0_14] : memref<2x1x32xf32, #tpu.memory_space<vmem>>, vector<2x1x32xf32>
    tpu.vector_store %arg4[%c0_12, %c0_13, %c0_14], %16 {strides = array<i32>} : memref<2x1x32xf32, #tpu.memory_space<vmem>>, vector<2x1x32xf32>,
    %c0_15 = arith.constant 0 : index
    %c0_16 = arith.constant 0 : index
    %c0_17 = arith.constant 0 : index
    %18 = vector.load %arg5[%c0_15, %c0_16, %c0_17] : memref<2x1x8xf32, #tpu.memory_space<vmem>>, vector<2x1x8xf32>
    tpu.vector_store %arg5[%c0_15, %c0_16, %c0_17], %15 {strides = array<i32>} : memref<2x1x8xf32, #tpu.memory_space<vmem>>, vector<2x1x8xf32>,
    return
  }
  func.func @transform_0(%arg0: i32) -> (i32, i32, i32) {
    %c0_i32 = arith.constant 0 : i32
    %c0_i32_0 = arith.constant 0 : i32
    %c0_i32_1 = arith.constant 0 : i32
    return %arg0, %c0_i32, %c0_i32_0 : i32, i32, i32
  }
  func.func @transform_1(%arg0: i32) -> (i32, i32, i32) {
    %c0_i32 = arith.constant 0 : i32
    %c0_i32_0 = arith.constant 0 : i32
    %c0_i32_1 = arith.constant 0 : i32
    return %arg0, %c0_i32, %c0_i32_0 : i32, i32, i32
  }
  func.func @transform_2(%arg0: i32) -> (i32, i32, i32) {
    %c0_i32 = arith.constant 0 : i32
    %c0_i32_0 = arith.constant 0 : i32
    %c0_i32_1 = arith.constant 0 : i32
    return %arg0, %c0_i32, %c0_i32_0 : i32, i32, i32
  }
  func.func @transform_3(%arg0: i32) -> (i32, i32, i32) {
    %c0_i32 = arith.constant 0 : i32
    %c0_i32_0 = arith.constant 0 : i32
    %c0_i32_1 = arith.constant 0 : i32
    return %arg0, %c0_i32, %c0_i32_0 : i32, i32, i32
  }
  func.func @transform_4(%arg0: i32) -> (i32, i32, i32) {
    %c0_i32 = arith.constant 0 : i32
    %c0_i32_0 = arith.constant 0 : i32
    %c0_i32_1 = arith.constant 0 : i32
    return %arg0, %c0_i32, %c0_i32_0 : i32, i32, i32
  }
}

</mosaic_0001>

<llo_original>
// kernel: tpu_custom_call.1
$region0: #{tpu_custom_call.1}
  #allocation0 [shape = 'u32[]', space=smem, size = 0x4, offset = 0x4, fixed_abs, tag = 'smem constant byte address 0x4 - core index']
  #allocation1 [shape = 'u32[144,128]{1,0:T(1,128)}', space=vmem, size = 0x12000, scoped, tag = 'internal scratch']
  %s0 = inlined_call_operand.hbm [shape: f32[2,1,32], index: 0, kind: input, shape index: {}]
  %s1 = inlined_call_operand.hbm [shape: f32[2,8,32], index: 1, kind: input, shape index: {}]
  %s2 = inlined_call_operand.hbm [shape: f32[2,8,32], index: 2, kind: input, shape index: {}]
  %s3 = inlined_call_operand.hbm [shape: f32[2,1,32], index: 3, kind: output, shape index: {0}]
  %s4 = inlined_call_operand.hbm [shape: f32[2,1,8], index: 4, kind: output, shape index: {1}]
  %5 = xla_tuple %s3, %s4
  %s6 = sld [smem:[#allocation0]]
  $region42: #{tpu_custom_call.1} parent=0
    _
  %s8 = ssub.s32 1, %s6
  %s9 = scalar_select 0, %s8, %s6
  $region1: #{tpu_custom_call.1} parent=0
    #allocation2 [shape = 'u8[1024]{0}', space=vmem, size = 0x400, scoped, tag = 'input window, operand 0, single buffered']
    #allocation3 [shape = 's32[1]{0}', space=sflag, size = 0x4, scoped, tag = 'scoped memory for tpu_custom_call.1']
    #allocation4 [shape = 's32[1]{0}', space=sflag, size = 0x4, scoped, tag = 'scoped memory for tpu_custom_call.1']
    #allocation5 [shape = 'u8[8192]{0}', space=vmem, size = 0x2000, scoped, tag = 'input window, operand 1, single buffered']
    #allocation6 [shape = 's32[1]{0}', space=sflag, size = 0x4, scoped, tag = 'scoped memory for tpu_custom_call.1']
    #allocation7 [shape = 'u8[8192]{0}', space=vmem, size = 0x2000, scoped, tag = 'input window, operand 2, single buffered']
    #allocation8 [shape = 'u8[1024]{0}', space=vmem, size = 0x400, scoped, tag = 'output window, operand 0, single buffered']
    #allocation9 [shape = 'u8[1024]{0}', space=vmem, size = 0x400, scoped, tag = 'output window, operand 1, single buffered']
    #allocation10 [shape = 's32[1]{0}', space=sflag, size = 0x4, scoped, tag = 'scoped memory for tpu_custom_call.1']
    %10 = vsyncpa [#allocation3], 0
    %11 = vsyncpa [#allocation6], 0
    %12 = vsyncpa [#allocation4], 0
    %13 = vsyncpa [#allocation10], 0
    // Predicated region
    $region2: #{tpu_custom_call.1} parent=1 // pred_check
      _
    $region3: #{tpu_custom_call.1} parent=1 // pred_check_branch
      %15 = sbr.rel (0) target = $region5
    $region4: #{tpu_custom_call.1} parent=1 // pred_region
      %s17 = ssub.s32 32, 32
      %18 = vsyncadd [#allocation3], %s17
      %s19 = sshll.u32 [#allocation2], 4
      %s20 = int_to_ptr.vmem [resolvable:$true] %s19
      %25 = dma.hbm_to_vmem [thread:$0]  %s0, 32, %s20, [#allocation3], 16, 16, 1
    $region5: #{tpu_custom_call.1} parent=1 // pred_fallthru
      _
    // Predicated region
    $region6: #{tpu_custom_call.1} parent=1 // pred_check
      _
    $region7: #{tpu_custom_call.1} parent=1 // pred_check_branch
      %27 = sbr.rel (0) target = $region9
    $region8: #{tpu_custom_call.1} parent=1 // pred_region
      %s29 = ssub.s32 256, 256
      %30 = vsyncadd [#allocation6], %s29
      %s31 = sshll.u32 [#allocation5], 4
      %s32 = int_to_ptr.vmem [resolvable:$true] %s31
      %37 = dma.hbm_to_vmem [thread:$0]  %s1, 256, %s32, [#allocation6], 128, 128, 8
    $region9: #{tpu_custom_call.1} parent=1 // pred_fallthru
      _
    // Predicated region
    $region10: #{tpu_custom_call.1} parent=1 // pred_check
      _
    $region11: #{tpu_custom_call.1} parent=1 // pred_check_branch
      %39 = sbr.rel (0) target = $region13
    $region12: #{tpu_custom_call.1} parent=1 // pred_region
      %s41 = ssub.s32 256, 256
      %42 = vsyncadd [#allocation6], %s41
      %s43 = sshll.u32 [#allocation7], 4
      %s44 = int_to_ptr.vmem [resolvable:$true] %s43
      %49 = dma.hbm_to_vmem [thread:$0]  %s2, 256, %s44, [#allocation6], 128, 128, 8
    $region13: #{tpu_custom_call.1} parent=1 // pred_fallthru
      _
    // Predicated region
    $region14: #{tpu_custom_call.1} parent=1 // pred_check
      _
    $region15: #{tpu_custom_call.1} parent=1 // pred_check_branch
      %51 = sbr.rel (0) target = $region17
    $region16: #{tpu_custom_call.1} parent=1 // pred_region
      %52 = dma.done [#allocation3], 32
    $region17: #{tpu_custom_call.1} parent=1 // pred_fallthru
      _
    // Predicated region
    $region18: #{tpu_custom_call.1} parent=1 // pred_check
      _
    $region19: #{tpu_custom_call.1} parent=1 // pred_check_branch
      %54 = sbr.rel (0) target = $region21
    $region20: #{tpu_custom_call.1} parent=1 // pred_region
      %55 = dma.done [#allocation6], 256
    $region21: #{tpu_custom_call.1} parent=1 // pred_fallthru
      _
    // Predicated region
    $region22: #{tpu_custom_call.1} parent=1 // pred_check
      _
    $region23: #{tpu_custom_call.1} parent=1 // pred_check_branch
      %57 = sbr.rel (0) target = $region25
    $region24: #{tpu_custom_call.1} parent=1 // pred_region
      %58 = dma.done [#allocation6], 256
    $region25: #{tpu_custom_call.1} parent=1 // pred_fallthru
      _
    %v59 = vld [vmem:[#allocation2] sm:$0x1]
    %v60 = vld [vmem:[#allocation2 + $0x1] sm:$0x1]
    %v61 = vld [vmem:[#allocation5] sm:$0xff]
    %v62 = vld [vmem:[#allocation5 + $0x8] sm:$0xff]
    %v63 = vld [vmem:[#allocation7] sm:$0xff]
    %v64 = vld [vmem:[#allocation7 + $0x8] sm:$0xff]
    %vm65 = vcmask 261120
    %v67 = vsel %vm65, %v59, 0
    %v70 = vsel %vm65, %v61, 0
    %72 = vmatprep.subr.mxu0 0.0
    %73 = vmatpush1.xpose.msra.mxu0 0.0
    %74 = vmatprep.subr.mxu0 0.0
    %75 = vmatpush1.xpose.msra.mxu0 0.0
    %76 = vmatprep.subr.mxu0 0.0
    %77 = vmatpush1.xpose.msra.mxu0 0.0
    %78 = vmatprep.subr.mxu0 0.0
    %79 = vmatpush1.xpose.msra.mxu0 0.0
    %80 = vmatprep.subr.mxu0 0.0
    %81 = vmatpush1.xpose.msra.mxu0 0.0
    %82 = vmatprep.subr.mxu0 0.0
    %83 = vmatpush1.xpose.msra.mxu0 0.0
    %84 = vmatprep.subr.mxu0 0.0
    %85 = vmatpush1.xpose.msra.mxu0 0.0
    %86 = vmatprep.subr.mxu0 0.0
    %87 = vmatpush1.xpose.msra.mxu0 0.0
    %88 = vmatprep.subr.mxu0 0.0
    %89 = vmatpush1.xpose.msra.mxu0 0.0
    %90 = vmatprep.subr.mxu0 0.0
    %91 = vmatpush1.xpose.msra.mxu0 0.0
    %92 = vmatprep.subr.mxu0 0.0
    %93 = vmatpush1.xpose.msra.mxu0 0.0
    %94 = vmatprep.subr.mxu0 0.0
    %95 = vmatpush1.xpose.msra.mxu0 0.0
    %96 = vmatprep.subr.mxu0 0.0
    %97 = vmatpush1.xpose.msra.mxu0 0.0
    %98 = vmatprep.subr.mxu0 0.0
    %99 = vmatpush1.xpose.msra.mxu0 0.0
    %100 = vmatprep.subr.mxu0 0.0
    %101 = vmatpush1.xpose.msra.mxu0 0.0
    %102 = vmatprep.subr.mxu0 0.0
    %103 = vmatpush1.xpose.msra.mxu0 %v70
    %104 = vmatprep.subr.mxu0 0.0
    %105 = vmatpush2.xpose.msra.mxu0 0.0
    %106 = vmatprep.subr.mxu0 0.0
    %107 = vmatpush2.xpose.msra.mxu0 0.0
    %108 = vmatprep.subr.mxu0 0.0
    %109 = vmatpush2.xpose.msra.mxu0 0.0
    %110 = vmatprep.subr.mxu0 0.0
    %111 = vmatpush2.xpose.msra.mxu0 0.0
    %112 = vmatprep.subr.mxu0 0.0
    %113 = vmatpush2.xpose.msra.mxu0 0.0
    %114 = vmatprep.subr.mxu0 0.0
    %115 = vmatpush2.xpose.msra.mxu0 0.0
    %116 = vmatprep.subr.mxu0 0.0
    %117 = vmatpush2.xpose.msra.mxu0 0.0
    %118 = vmatprep.subr.mxu0 0.0
    %119 = vmatpush2.xpose.msra.mxu0 0.0
    %120 = vmatprep.subr.mxu0 0.0
    %121 = vmatpush2.xpose.msra.mxu0 0.0
    %122 = vmatprep.subr.mxu0 0.0
    %123 = vmatpush2.xpose.msra.mxu0 0.0
    %124 = vmatprep.subr.mxu0 0.0
    %125 = vmatpush2.xpose.msra.mxu0 0.0
    %126 = vmatprep.subr.mxu0 0.0
    %127 = vmatpush2.xpose.msra.mxu0 0.0
    %128 = vmatprep.subr.mxu0 0.0
    %129 = vmatpush2.xpose.msra.mxu0 0.0
    %130 = vmatprep.subr.mxu0 0.0
    %131 = vmatpush2.xpose.msra.mxu0 0.0
    %132 = vmatprep.subr.mxu0 0.0
    %133 = vmatpush2.xpose.msra.mxu0 0.0
    %134 = vmatprep.subr.mxu0 0.0
    %135 = vmatpush2.xpose.msra.mxu0 0.0
    %136 = vmatprep.mubr.f32.mxu0 0.0
    %137 = vmatmul.mubr.f32.gmra.mxu0 %v67
    %v138 = vpop.f32.mrf.mxu0
    %v139 = vadd.f32 0.0, %v138
    %v140 = vpop.f32.mrf.mxu0
    %141 = vdwg.mxu0
    %v143 = vsel %vm65, %v60, 0
    %v146 = vsel %vm65, %v62, 0
    %148 = vmatprep.subr.mxu0 0.0
    %149 = vmatpush1.xpose.msra.mxu0 0.0
    %150 = vmatprep.subr.mxu0 0.0
    %151 = vmatpush1.xpose.msra.mxu0 0.0
    %152 = vmatprep.subr.mxu0 0.0
    %153 = vmatpush1.xpose.msra.mxu0 0.0
    %154 = vmatprep.subr.mxu0 0.0
    %155 = vmatpush1.xpose.msra.mxu0 0.0
    %156 = vmatprep.subr.mxu0 0.0
    %157 = vmatpush1.xpose.msra.mxu0 0.0
    %158 = vmatprep.subr.mxu0 0.0
    %159 = vmatpush1.xpose.msra.mxu0 0.0
    %160 = vmatprep.subr.mxu0 0.0
    %161 = vmatpush1.xpose.msra.mxu0 0.0
    %162 = vmatprep.subr.mxu0 0.0
    %163 = vmatpush1.xpose.msra.mxu0 0.0
    %164 = vmatprep.subr.mxu0 0.0
    %165 = vmatpush1.xpose.msra.mxu0 0.0
    %166 = vmatprep.subr.mxu0 0.0
    %167 = vmatpush1.xpose.msra.mxu0 0.0
    %168 = vmatprep.subr.mxu0 0.0
    %169 = vmatpush1.xpose.msra.mxu0 0.0
    %170 = vmatprep.subr.mxu0 0.0
    %171 = vmatpush1.xpose.msra.mxu0 0.0
    %172 = vmatprep.subr.mxu0 0.0
    %173 = vmatpush1.xpose.msra.mxu0 0.0
    %174 = vmatprep.subr.mxu0 0.0
    %175 = vmatpush1.xpose.msra.mxu0 0.0
    %176 = vmatprep.subr.mxu0 0.0
    %177 = vmatpush1.xpose.msra.mxu0 0.0
    %178 = vmatprep.subr.mxu0 0.0
    %179 = vmatpush1.xpose.msra.mxu0 %v146
    %180 = vmatprep.subr.mxu0 0.0
    %181 = vmatpush2.xpose.msra.mxu0 0.0
    %182 = vmatprep.subr.mxu0 0.0
    %183 = vmatpush2.xpose.msra.mxu0 0.0
    %184 = vmatprep.subr.mxu0 0.0
    %185 = vmatpush2.xpose.msra.mxu0 0.0
    %186 = vmatprep.subr.mxu0 0.0
    %187 = vmatpush2.xpose.msra.mxu0 0.0
    %188 = vmatprep.subr.mxu0 0.0
    %189 = vmatpush2.xpose.msra.mxu0 0.0
    %190 = vmatprep.subr.mxu0 0.0
    %191 = vmatpush2.xpose.msra.mxu0 0.0
    %192 = vmatprep.subr.mxu0 0.0
    %193 = vmatpush2.xpose.msra.mxu0 0.0
    %194 = vmatprep.subr.mxu0 0.0
    %195 = vmatpush2.xpose.msra.mxu0 0.0
    %196 = vmatprep.subr.mxu0 0.0
    %197 = vmatpush2.xpose.msra.mxu0 0.0
    %198 = vmatprep.subr.mxu0 0.0
    %199 = vmatpush2.xpose.msra.mxu0 0.0
    %200 = vmatprep.subr.mxu0 0.0
    %201 = vmatpush2.xpose.msra.mxu0 0.0
    %202 = vmatprep.subr.mxu0 0.0
    %203 = vmatpush2.xpose.msra.mxu0 0.0
    %204 = vmatprep.subr.mxu0 0.0
    %205 = vmatpush2.xpose.msra.mxu0 0.0
    %206 = vmatprep.subr.mxu0 0.0
    %207 = vmatpush2.xpose.msra.mxu0 0.0
    %208 = vmatprep.subr.mxu0 0.0
    %209 = vmatpush2.xpose.msra.mxu0 0.0
    %210 = vmatprep.subr.mxu0 0.0
    %211 = vmatpush2.xpose.msra.mxu0 0.0
    %212 = vmatprep.mubr.f32.mxu0 0.0
    %213 = vmatmul.mubr.f32.gmra.mxu0 %v143
    %v214 = vpop.f32.mrf.mxu0
    %v215 = vadd.f32 0.0, %v214
    %v216 = vpop.f32.mrf.mxu0
    %217 = vdwg.mxu0
    %v218 = vmul.f32 %v139, 0.17677669
    %v219 = vmul.f32 %v215, 0.17677669
    %vm220 = vcmask 57344
    %v221 = vsel %vm220, %v218, -inf
    %222 = vmax.xlane.f32.xlu0 %v221
    %v223 = vpop.xlane.xlu0 %222
    %v224 = vsel %vm220, %v219, -inf
    %225 = vmax.xlane.f32.xlu0 %v224
    %v226 = vpop.xlane.xlu0 %225
    %v227 = vsub.f32 %v218, %v223
    %v228 = vsub.f32 %v219, %v226
    %v229 = vmul.f32 %v227, 1.442695
    %v230 = vpow.pop %v229
    %v231 = vmul.f32 %v228, 1.442695
    %v232 = vpow.pop %v231
    %v233 = vsel %vm220, %v230, 0.0
    %234 = vadd.xlane.f32.xlu0 %v233
    %v235 = vpop.xlane.xlu0 %234
    %v236 = vsel %vm220, %v232, 0.0
    %237 = vadd.xlane.f32.xlu0 %v236
    %v238 = vpop.xlane.xlu0 %237
    %v239 = vrcp.pop %v235
    %v240 = vrcp.pop %v238
    %v241 = vmul.f32 %v230, %v239
    %v242 = vmul.f32 %v232, %v240
    %vm243 = vcmask 64512
    %v245 = vsel %vm243, %v241, 0
    %247 = vmatprep.subr.mxu0 0.0
    %248 = vmatpush1.msra.mxu0 0.0
    %249 = vmatprep.subr.mxu0 0.0
    %250 = vmatpush1.msra.mxu0 0.0
    %251 = vmatprep.subr.mxu0 0.0
    %252 = vmatpush1.msra.mxu0 0.0
    %253 = vmatprep.subr.mxu0 0.0
    %254 = vmatpush1.msra.mxu0 0.0
    %255 = vmatprep.subr.mxu0 0.0
    %256 = vmatpush1.msra.mxu0 0.0
    %257 = vmatprep.subr.mxu0 0.0
    %258 = vmatpush1.msra.mxu0 0.0
    %259 = vmatprep.subr.mxu0 0.0
    %260 = vmatpush1.msra.mxu0 0.0
    %261 = vmatprep.subr.mxu0 0.0
    %262 = vmatpush1.msra.mxu0 0.0
    %263 = vmatprep.subr.mxu0 0.0
    %264 = vmatpush1.msra.mxu0 0.0
    %265 = vmatprep.subr.mxu0 0.0
    %266 = vmatpush1.msra.mxu0 0.0
    %267 = vmatprep.subr.mxu0 0.0
    %268 = vmatpush1.msra.mxu0 0.0
    %269 = vmatprep.subr.mxu0 0.0
    %270 = vmatpush1.msra.mxu0 0.0
    %271 = vmatprep.subr.mxu0 0.0
    %272 = vmatpush1.msra.mxu0 0.0
    %273 = vmatprep.subr.mxu0 0.0
    %274 = vmatpush1.msra.mxu0 0.0
    %275 = vmatprep.subr.mxu0 0.0
    %276 = vmatpush1.msra.mxu0 0.0
    %277 = vmatprep.subr.mxu0 0.0
    %278 = vmatpush1.msra.mxu0 %v63
    %279 = vmatprep.subr.mxu0 0.0
    %280 = vmatpush2.msra.mxu0 0.0
    %281 = vmatprep.subr.mxu0 0.0
    %282 = vmatpush2.msra.mxu0 0.0
    %283 = vmatprep.subr.mxu0 0.0
    %284 = vmatpush2.msra.mxu0 0.0
    %285 = vmatprep.subr.mxu0 0.0
    %286 = vmatpush2.msra.mxu0 0.0
    %287 = vmatprep.subr.mxu0 0.0
    %288 = vmatpush2.msra.mxu0 0.0
    %289 = vmatprep.subr.mxu0 0.0
    %290 = vmatpush2.msra.mxu0 0.0
    %291 = vmatprep.subr.mxu0 0.0
    %292 = vmatpush2.msra.mxu0 0.0
    %293 = vmatprep.subr.mxu0 0.0
    %294 = vmatpush2.msra.mxu0 0.0
    %295 = vmatprep.subr.mxu0 0.0
    %296 = vmatpush2.msra.mxu0 0.0
    %297 = vmatprep.subr.mxu0 0.0
    %298 = vmatpush2.msra.mxu0 0.0
    %299 = vmatprep.subr.mxu0 0.0
    %300 = vmatpush2.msra.mxu0 0.0
    %301 = vmatprep.subr.mxu0 0.0
    %302 = vmatpush2.msra.mxu0 0.0
    %303 = vmatprep.subr.mxu0 0.0
    %304 = vmatpush2.msra.mxu0 0.0
    %305 = vmatprep.subr.mxu0 0.0
    %306 = vmatpush2.msra.mxu0 0.0
    %307 = vmatprep.subr.mxu0 0.0
    %308 = vmatpush2.msra.mxu0 0.0
    %309 = vmatprep.subr.mxu0 0.0
    %310 = vmatpush2.msra.mxu0 0.0
    %311 = vmatprep.mubr.f32.mxu0 0.0
    %312 = vmatmul.mubr.f32.gmra.mxu0 %v245
    %v313 = vpop.f32.mrf.mxu0
    %v314 = vadd.f32 0.0, %v313
    %v315 = vpop.f32.mrf.mxu0
    %316 = vdwg.mxu0
    %v318 = vsel %vm243, %v242, 0
    %320 = vmatprep.subr.mxu0 0.0
    %321 = vmatpush1.msra.mxu0 0.0
    %322 = vmatprep.subr.mxu0 0.0
    %323 = vmatpush1.msra.mxu0 0.0
    %324 = vmatprep.subr.mxu0 0.0
    %325 = vmatpush1.msra.mxu0 0.0
    %326 = vmatprep.subr.mxu0 0.0
    %327 = vmatpush1.msra.mxu0 0.0
    %328 = vmatprep.subr.mxu0 0.0
    %329 = vmatpush1.msra.mxu0 0.0
    %330 = vmatprep.subr.mxu0 0.0
    %331 = vmatpush1.msra.mxu0 0.0
    %332 = vmatprep.subr.mxu0 0.0
    %333 = vmatpush1.msra.mxu0 0.0
    %334 = vmatprep.subr.mxu0 0.0
    %335 = vmatpush1.msra.mxu0 0.0
    %336 = vmatprep.subr.mxu0 0.0
    %337 = vmatpush1.msra.mxu0 0.0
    %338 = vmatprep.subr.mxu0 0.0
    %339 = vmatpush1.msra.mxu0 0.0
    %340 = vmatprep.subr.mxu0 0.0
    %341 = vmatpush1.msra.mxu0 0.0
    %342 = vmatprep.subr.mxu0 0.0
    %343 = vmatpush1.msra.mxu0 0.0
    %344 = vmatprep.subr.mxu0 0.0
    %345 = vmatpush1.msra.mxu0 0.0
    %346 = vmatprep.subr.mxu0 0.0
    %347 = vmatpush1.msra.mxu0 0.0
    %348 = vmatprep.subr.mxu0 0.0
    %349 = vmatpush1.msra.mxu0 0.0
    %350 = vmatprep.subr.mxu0 0.0
    %351 = vmatpush1.msra.mxu0 %v64
    %352 = vmatprep.subr.mxu0 0.0
    %353 = vmatpush2.msra.mxu0 0.0
    %354 = vmatprep.subr.mxu0 0.0
    %355 = vmatpush2.msra.mxu0 0.0
    %356 = vmatprep.subr.mxu0 0.0
    %357 = vmatpush2.msra.mxu0 0.0
    %358 = vmatprep.subr.mxu0 0.0
    %359 = vmatpush2.msra.mxu0 0.0
    %360 = vmatprep.subr.mxu0 0.0
    %361 = vmatpush2.msra.mxu0 0.0
    %362 = vmatprep.subr.mxu0 0.0
    %363 = vmatpush2.msra.mxu0 0.0
    %364 = vmatprep.subr.mxu0 0.0
    %365 = vmatpush2.msra.mxu0 0.0
    %366 = vmatprep.subr.mxu0 0.0
    %367 = vmatpush2.msra.mxu0 0.0
    %368 = vmatprep.subr.mxu0 0.0
    %369 = vmatpush2.msra.mxu0 0.0
    %370 = vmatprep.subr.mxu0 0.0
    %371 = vmatpush2.msra.mxu0 0.0
    %372 = vmatprep.subr.mxu0 0.0
    %373 = vmatpush2.msra.mxu0 0.0
    %374 = vmatprep.subr.mxu0 0.0
    %375 = vmatpush2.msra.mxu0 0.0
    %376 = vmatprep.subr.mxu0 0.0
    %377 = vmatpush2.msra.mxu0 0.0
    %378 = vmatprep.subr.mxu0 0.0
    %379 = vmatpush2.msra.mxu0 0.0
    %380 = vmatprep.subr.mxu0 0.0
    %381 = vmatpush2.msra.mxu0 0.0
    %382 = vmatprep.subr.mxu0 0.0
    %383 = vmatpush2.msra.mxu0 0.0
    %384 = vmatprep.mubr.f32.mxu0 0.0
    %385 = vmatmul.mubr.f32.gmra.mxu0 %v318
    %v386 = vpop.f32.mrf.mxu0
    %v387 = vadd.f32 0.0, %v386
    %v388 = vpop.f32.mrf.mxu0
    %389 = vdwg.mxu0
    %vm390 = vcmask 253952
    %391 = vst.msk [vmem:[#allocation8] sm:$0x1] %vm390, %v314
    %392 = vst.msk [vmem:[#allocation8 + $0x1] sm:$0x1] %vm390, %v387
    %393 = vst.msk [vmem:[#allocation9] sm:$0x1] %vm220, %v241
    %394 = vst.msk [vmem:[#allocation9 + $0x1] sm:$0x1] %vm220, %v242
    // Predicated region
    $region26: #{tpu_custom_call.1} parent=1 // pred_check
      _
    $region27: #{tpu_custom_call.1} parent=1 // pred_check_branch
      %396 = sbr.rel (0) target = $region29
    $region28: #{tpu_custom_call.1} parent=1 // pred_region
      %s398 = ssub.s32 32, 32
      %399 = vsyncadd [#allocation4], %s398
      %s400 = sshll.u32 [#allocation8], 4
      %s401 = int_to_ptr.vmem [resolvable:$true] %s400
      %406 = dma.vmem_to_hbm [thread:$0]  %s401, 32, %s3, [#allocation4], 16, 16, 1
    $region29: #{tpu_custom_call.1} parent=1 // pred_fallthru
      _
    // Predicated region
    $region30: #{tpu_custom_call.1} parent=1 // pred_check
      _
    $region31: #{tpu_custom_call.1} parent=1 // pred_check_branch
      %408 = sbr.rel (0) target = $region33
    $region32: #{tpu_custom_call.1} parent=1 // pred_region
      %s410 = ssub.s32 32, 32
      %411 = vsyncadd [#allocation10], %s410
      %s412 = sshll.u32 [#allocation9], 4
      %s413 = int_to_ptr.vmem [resolvable:$true] %s412
      %418 = dma.vmem_to_hbm [thread:$0]  %s413, 32, %s4, [#allocation10], 16, 16, 1
    $region33: #{tpu_custom_call.1} parent=1 // pred_fallthru
      _
    // Predicated region
    $region34: #{tpu_custom_call.1} parent=1 // pred_check
      _
    $region35: #{tpu_custom_call.1} parent=1 // pred_check_branch
      %420 = sbr.rel (0) target = $region37
    $region36: #{tpu_custom_call.1} parent=1 // pred_region
      %421 = dma.done [#allocation4], 32
    $region37: #{tpu_custom_call.1} parent=1 // pred_fallthru
      _
    // Predicated region
    $region38: #{tpu_custom_call.1} parent=1 // pred_check
      _
    $region39: #{tpu_custom_call.1} parent=1 // pred_check_branch
      %423 = sbr.rel (0) target = $region41
    $region40: #{tpu_custom_call.1} parent=1 // pred_region
      %424 = dma.done [#allocation10], 32
    $region41: #{tpu_custom_call.1} parent=1 // pred_fallthru
      _
    %425 = vsyncpa [#allocation3], 1
    %426 = vsyncpa [#allocation6], 1
    %427 = vsyncpa [#allocation4], 1
    %428 = vsyncpa [#allocation10], 1

</llo_original>
